<compile_context>
chip_gen: v6e
topology: v6e:2x2x1
jax: 0.10.0
libtpu: 0.0.40
codegen_flags: <defaults>
</compile_context>

<pallas_src>
import math

import numpy as np
import jax
import jax.numpy as jnp
from jax.experimental import pallas as pl
from jax.experimental.pallas import tpu as pltpu


def _round_up(x, m):
    return (x + m - 1) // m * m


def _make_kernel(TM, SC, Q, CR):
    """Returns (kernel_fn, scratch_shapes) specialized for (TM, SC, Q)."""
    if Q == 1:
        # No tap overlap: pure matmul + bias, no carry scratch at all.
        def kernel_q1(x_ref, w_ref, b_ref, o_ref):
            acc = jnp.dot(x_ref[...], w_ref[0],
                          preferred_element_type=jnp.float32)
            o_ref[...] = (acc + b_ref[...]).astype(o_ref.dtype)

        return kernel_q1, []

    def kernel(x_ref, w_ref, b_ref, o_ref, carry_ref):
        """One (batch, time-tile) grid step.

        x_ref:     (TM, Cin)        bf16 input rows (time-major)
        w_ref:     (Q, Cin, SC)     bf16 packed taps, SC = S*Cout
        b_ref:     (1, SC)          f32 bias replicated over the S phases
        o_ref:     (TM, SC)         output super-rows (row t -> times t*S..t*S+S-1)
        carry_ref: (CR, SC)         f32 overlap spilling into the next tile
        """
        i = pl.program_id(1)

        @pl.when(i == 0)
        def _():
            # New batch: drop any stale carry.
            carry_ref[...] = jnp.zeros_like(carry_ref)

        carry_in = carry_ref[...]
        x = x_ref[...]

        # Tap group 0: lands directly on this tile's rows.
        acc = jnp.dot(x, w_ref[0], preferred_element_type=jnp.float32)

        # Tap groups 1..Q-1: shift down by q rows on the value (vreg/XLU work),
        # spill the last q rows into the carry for the next tile.
        new_carry = jnp.zeros((CR, SC), jnp.float32)
        for q in range(1, Q):
            p_q = jnp.dot(x, w_ref[q], preferred_element_type=jnp.float32)
            shifted = jnp.concatenate(
                [jnp.zeros((q, SC), jnp.float32), p_q[:TM - q, :]], axis=0)
            acc = acc + shifted
            tail = p_q[TM - q:, :]                       # (q, SC)
            if CR > q:
                tail = jnp.pad(tail, ((0, CR - q), (0, 0)))
            new_carry = new_carry + tail
        carry_ref[...] = new_carry

        out = acc + b_ref[...]
        # Single full-tile store, then a tiny masked store folding in the carry
        # from the previous tile on the first CR (< 8) rows.
        o_ref[...] = out.astype(o_ref.dtype)
        o_ref[:CR, :] = (out[:CR, :] + carry_in).astype(o_ref.dtype)

    return kernel, [pltpu.VMEM((CR, SC), jnp.float32)]


def sconv_transpose_1d(x, weight, bias, stride, causal=False,
                       trim_right_ratio=1.0, tile_rows=1024):
    """x: (B, Cin, L) NCW.  weight: (Cin, Cout, K).  bias: (Cout,)."""
    B, Cin, L = x.shape
    Cin_w, Cout, K = weight.shape
    assert Cin_w == Cin
    S = int(stride)
    assert K >= S >= 1, "SConvTranspose1d assumes kernel_size >= stride"

    Q = -(-K // S)                      # taps overlapping each output phase
    Kpad = Q * S
    SC = S * Cout
    CR = max(Q - 1, 1)
    out_dtype = x.dtype

    # ---- host-side layout prep -------------------------------------------
    # weight (Cin, Cout, K) -> (Q, Cin, S*Cout); [q, ci, s*Cout+c] = w[ci, c, q*S+s].
    w_t = jnp.transpose(weight, (0, 2, 1))                 # (Cin, K, Cout)
    if Kpad > K:
        w_t = jnp.pad(w_t, ((0, 0), (0, Kpad - K), (0, 0)))
    w3 = (w_t.reshape(Cin, Q, S, Cout)
              .transpose(1, 0, 2, 3)
              .reshape(Q, Cin, SC)
              .astype(jnp.bfloat16))                        # bf16 MXU operand

    # bias replicated over the S output phases packed into the lane dim (f32).
    b2 = jnp.tile(bias.astype(jnp.float32), S).reshape(1, SC)

    # ---- tile sizing from device VMEM -------------------------------------
    try:
        vmem_cap = int(pltpu.get_tpu_info().vmem_capacity_bytes)
    except Exception:
        vmem_cap = 64 * 1024 * 1024      # conservative (v7x-sized) fallback
    budget = int(vmem_cap * 0.70)
    vmem_limit = int(vmem_cap * 0.85)

    out_itemsize = jnp.dtype(out_dtype).itemsize

    def vmem_need(tm):
        x_bytes = 2 * tm * Cin * 2                    # double-buffered bf16 input
        o_bytes = 2 * tm * SC * out_itemsize          # double-buffered output
        w_bytes = 2 * Q * Cin * SC * 2                # resident weights (worst case 2 bufs)
        bias_bytes = 2 * SC * 4
        carry_bytes = 8 * SC * 4
        live = 3 * tm * SC * 4                        # acc + current p_q + shift temp (f32)
        return x_bytes + o_bytes + w_bytes + bias_bytes + carry_bytes + live

    rows_needed = L + Q - 1             # output super-rows that must be covered
    TM_min = max(8, _round_up(Q, 8))
    TM = min(int(tile_rows), _round_up(rows_needed, 8))
    TM = max(_round_up(TM, 8), TM_min)
    while TM > TM_min and vmem_need(TM) > budget:
        TM = max(_round_up(TM // 2, 8), TM_min)

    NT = -(-rows_needed // TM)
    L_pad = NT * TM

    # x (B, Cin, L) -> time-major bf16 rows (B, L_pad, Cin), zero-padded tail.
    x2 = jnp.transpose(x, (0, 2, 1)).astype(jnp.bfloat16)
    x2p = jnp.pad(x2, ((0, 0), (0, L_pad - L), (0, 0)))

    kernel, scratch_shapes = _make_kernel(TM, SC, Q, CR)

    out = pl.pallas_call(
        kernel,
        out_shape=jax.ShapeDtypeStruct((B, L_pad, SC), out_dtype),
        grid=(B, NT),
        in_specs=[
            pl.BlockSpec((None, TM, Cin), lambda b, i: (b, i, 0)),
            pl.BlockSpec((Q, Cin, SC), lambda b, i: (0, 0, 0)),   # resident weights
            pl.BlockSpec((1, SC), lambda b, i: (0, 0)),           # resident bias
        ],
        out_specs=pl.BlockSpec((None, TM, SC), lambda b, i: (b, i, 0)),
        scratch_shapes=scratch_shapes,
        compiler_params=pltpu.CompilerParams(
            # Time axis MUST stay "arbitrary" (sequential) for the carry.
            dimension_semantics=("parallel", "arbitrary"),
            vmem_limit_bytes=vmem_limit,
        ),
    )(x2p, w3, b2)

    # Packed super-rows -> flat time axis (metadata reshape), then unpad1d trim
    # and back to NCW.
    padding_total = K - S
    if causal:
        padding_right = math.ceil(padding_total * trim_right_ratio)
        padding_left = padding_total - padding_right
    else:
        padding_right = padding_total // 2
        padding_left = padding_total - padding_right

    L_out = L * S                              # (L-1)*S + K - padding_total
    y_rows = out.reshape(B, L_pad * S, Cout)   # (B, time, Cout)
    y = y_rows[:, padding_left:padding_left + L_out, :]
    return jnp.transpose(y, (0, 2, 1)).astype(x.dtype)


# ---------------------------------------------------------------------------
# Reference + test harness
# ---------------------------------------------------------------------------
def _reference(x, weight, bias, stride, causal=False, trim_right_ratio=1.0):
    """Pure numpy reference for ConvTranspose1d + unpad1d (PyTorch semantics)."""
    x = np.asarray(x, np.float32)
    w = np.asarray(weight, np.float32)
    b = np.asarray(bias, np.float32)
    B, Cin, L = x.shape
    _, Cout, K = w.shape
    S = int(stride)
    L_full = (L - 1) * S + K
    y = np.zeros((B, Cout, L_full), np.float32) + b[None, :, None]
    for bb in range(B):
        for j in range(L):
            for k in range(K):
                y[bb, :, j * S + k] += x[bb, :, j] @ w[:, :, k]
    padding_total = K - S
    if causal:
        padding_right = math.ceil(padding_total * trim_right_ratio)
        padding_left = padding_total - padding_right
    else:
        padding_right = padding_total // 2
        padding_left = padding_total - padding_right
    end = y.shape[-1] - padding_right
    return y[..., padding_left:end]


def _bf16_round(a):
    """Quantize to bf16 and back (matches what the kernel feeds the MXU)."""
    return np.asarray(jnp.asarray(a).astype(jnp.bfloat16).astype(jnp.float32))


if __name__ == "__main__":
    key = jax.random.PRNGKey(0)

    def make_params(k, Cin, Cout, K):
        kw, kb = jax.random.split(k)
        bound = 1.0 / math.sqrt(Cout * K)
        w = jax.random.uniform(kw, (Cin, Cout, K), jnp.float32, -bound, bound)
        b = jax.random.uniform(kb, (Cout,), jnp.float32, -bound, bound)
        return w, b

    configs = [
        # (B, Cin, Cout, K, S, L, causal, trim_right_ratio, tile_rows)
        (2, 4, 8, 4, 2, 16, False, 1.0, 1024),  # single time tile
        (2, 4, 8, 4, 2, 16, True, 1.0, 8),      # causal trim + multi-tile carry
        (2, 4, 8, 5, 2, 16, False, 1.0, 8),     # K % S != 0 (padded taps, Q=3)
        (2, 4, 8, 2, 2, 16, False, 1.0, 1024),  # K == S (Q=1, no-carry kernel)
    ]

    for cfg_id, (B, Cin, Cout, K, S, L, causal, trr, tr) in enumerate(configs):
        key, kx, kp = jax.random.split(key, 3)
        x = jax.random.normal(kx, (B, Cin, L), dtype=jnp.float32)
        weight, bias = make_params(kp, Cin, Cout, K)

        y = sconv_transpose_1d(x, weight, bias, stride=S, causal=causal,
                               trim_right_ratio=trr, tile_rows=tr)
        y = jax.block_until_ready(y)

        # Reference on bf16-rounded operands (kernel uses bf16 MXU operands with
        # f32 accumulation), so tolerances stay tight.
        y_ref = _reference(_bf16_round(x), _bf16_round(weight), bias,
                           stride=S, causal=causal, trim_right_ratio=trr)
        assert y.shape == y_ref.shape, (cfg_id, y.shape, y_ref.shape)
        np.testing.assert_allclose(np.asarray(y), y_ref, rtol=1e-4, atol=1e-4)

    print("KERNEL_OK")
</pallas_src>

<mosaic_0001>
module attributes {stable_mosaic.version = 11 : i64} {
  func.func @kernel(%arg0: i32, %arg1: i32, %arg2: memref<1x24x4xbf16, #tpu.memory_space<vmem>>, %arg3: memref<2x4x16xbf16, #tpu.memory_space<vmem>>, %arg4: memref<1x16xf32, #tpu.memory_space<vmem>>, %arg5: memref<1x24x16xf32, #tpu.memory_space<vmem>>, %arg6: memref<1x16xf32, #tpu.memory_space<vmem>>) attributes {dimension_semantics = [#tpu.dimension_semantics<parallel>, #tpu.dimension_semantics<arbitrary>], iteration_bounds = array<i64: 2, 1>, scalar_prefetch = 0 : i64, scratch_operands = 1 : i64, tpu.core_type = #tpu.core_type<tc>, window_params = [{transform_indices = @transform_0, window_bounds = array<i64: 1, 24, 4>}, {pipeline_mode = #tpu.pipeline_mode<synchronous>, transform_indices = @transform_1, window_bounds = array<i64: 2, 4, 16>}, {pipeline_mode = #tpu.pipeline_mode<synchronous>, transform_indices = @transform_2, window_bounds = array<i64: 1, 16>}, {transform_indices = @transform_3, window_bounds = array<i64: 1, 24, 16>}]} {
    %c0_i32 = arith.constant 0 : i32
    %0 = arith.cmpi eq, %arg1, %c0_i32 : i32
    %1 = arith.extui %0 : i1 to i32
    %c0_i32_0 = arith.constant 0 : i32
    %2 = arith.cmpi ne, %1, %c0_i32_0 : i32
    scf.if %2 {
      %cst_23 = arith.constant 0.000000e+00 : f32
      %31 = vector.broadcast %cst_23 : f32 to vector<1x16xf32>
      %c0_24 = arith.constant 0 : index
      %c0_25 = arith.constant 0 : index
      %32 = vector.load %arg6[%c0_24, %c0_25] : memref<1x16xf32, #tpu.memory_space<vmem>>, vector<1x16xf32>
      tpu.vector_store %arg6[%c0_24, %c0_25], %31 {strides = array<i32>} : memref<1x16xf32, #tpu.memory_space<vmem>>, vector<1x16xf32>,
    } else {
    }
    %c0 = arith.constant 0 : index
    %c0_1 = arith.constant 0 : index
    %3 = vector.load %arg6[%c0, %c0_1] : memref<1x16xf32, #tpu.memory_space<vmem>>, vector<1x16xf32>
    %c0_2 = arith.constant 0 : index
    %c0_3 = arith.constant 0 : index
    %c0_4 = arith.constant 0 : index
    %4 = vector.load %arg2[%c0_2, %c0_3, %c0_4] : memref<1x24x4xbf16, #tpu.memory_space<vmem>>, vector<1x24x4xbf16>
    %5 = vector.shape_cast %4 : vector<1x24x4xbf16> to vector<24x4xbf16>
    %c0_5 = arith.constant 0 : index
    %c0_6 = arith.constant 0 : index
    %c0_7 = arith.constant 0 : index
    %6 = vector.load %arg3[%c0_5, %c0_6, %c0_7] : memref<2x4x16xbf16, #tpu.memory_space<vmem>>, vector<1x4x16xbf16>
    %7 = vector.shape_cast %6 : vector<1x4x16xbf16> to vector<4x16xbf16>
    %cst = arith.constant dense<0.000000e+00> : vector<24x16xf32>
    %8 = tpu.matmul %5, %7, %cst {dimension_numbers = #tpu.dot_dimension_numbers<[1], [0], [0], [1], [0, 0, 1, 1], [], []>} : vector<24x4xbf16>, vector<4x16xbf16>, vector<24x16xf32> -> vector<24x16xf32>
    %cst_8 = arith.constant 0.000000e+00 : f32
    %9 = vector.broadcast %cst_8 : f32 to vector<1x16xf32>
    %c1 = arith.constant 1 : index
    %c0_9 = arith.constant 0 : index
    %c0_10 = arith.constant 0 : index
    %10 = vector.load %arg3[%c1, %c0_9, %c0_10] : memref<2x4x16xbf16, #tpu.memory_space<vmem>>, vector<1x4x16xbf16>
    %11 = vector.shape_cast %10 : vector<1x4x16xbf16> to vector<4x16xbf16>
    %cst_11 = arith.constant dense<0.000000e+00> : vector<24x16xf32>
    %12 = tpu.matmul %5, %11, %cst_11 {dimension_numbers = #tpu.dot_dimension_numbers<[1], [0], [0], [1], [0, 0, 1, 1], [], []>} : vector<24x4xbf16>, vector<4x16xbf16>, vector<24x16xf32> -> vector<24x16xf32>
    %cst_12 = arith.constant 0.000000e+00 : f32
    %13 = vector.broadcast %cst_12 : f32 to vector<1x16xf32>
    %14 = vector.extract_strided_slice %12 {offsets = [0, 0], sizes = [23, 16], strides = [1, 1]} : vector<24x16xf32> to vector<23x16xf32>
    %15 = tpu.concatenate %13, %14 in 0 : vector<1x16xf32>, vector<23x16xf32> -> vector<24x16xf32>
    %16 = arith.addf %8, %15 : vector<24x16xf32>
    %17 = vector.extract_strided_slice %12 {offsets = [23, 0], sizes = [1, 16], strides = [1, 1]} : vector<24x16xf32> to vector<1x16xf32>
    %18 = arith.addf %9, %17 : vector<1x16xf32>
    %c0_13 = arith.constant 0 : index
    %c0_14 = arith.constant 0 : index
    %19 = vector.load %arg6[%c0_13, %c0_14] : memref<1x16xf32, #tpu.memory_space<vmem>>, vector<1x16xf32>
    tpu.vector_store %arg6[%c0_13, %c0_14], %18 {strides = array<i32>} : memref<1x16xf32, #tpu.memory_space<vmem>>, vector<1x16xf32>,
    %c0_15 = arith.constant 0 : index
    %c0_16 = arith.constant 0 : index
    %20 = vector.load %arg4[%c0_15, %c0_16] : memref<1x16xf32, #tpu.memory_space<vmem>>, vector<1x16xf32>
    %21 = vector.broadcast %20 : vector<1x16xf32> to vector<24x16xf32>
    %22 = arith.addf %16, %21 : vector<24x16xf32>
    %c0_17 = arith.constant 0 : index
    %c0_18 = arith.constant 0 : index
    %c0_19 = arith.constant 0 : index
    %23 = vector.load %arg5[%c0_17, %c0_18, %c0_19] : memref<1x24x16xf32, #tpu.memory_space<vmem>>, vector<1x24x16xf32>
    %24 = vector.shape_cast %23 : vector<1x24x16xf32> to vector<24x16xf32>
    %25 = vector.shape_cast %22 : vector<24x16xf32> to vector<1x24x16xf32>
    tpu.vector_store %arg5[%c0_17, %c0_18, %c0_19], %25 {strides = array<i32>} : memref<1x24x16xf32, #tpu.memory_space<vmem>>, vector<1x24x16xf32>,
    %26 = vector.extract_strided_slice %22 {offsets = [0, 0], sizes = [1, 16], strides = [1, 1]} : vector<24x16xf32> to vector<1x16xf32>
    %27 = arith.addf %26, %3 : vector<1x16xf32>
    %c0_20 = arith.constant 0 : index
    %c0_21 = arith.constant 0 : index
    %c0_22 = arith.constant 0 : index
    %28 = vector.load %arg5[%c0_20, %c0_21, %c0_22] : memref<1x24x16xf32, #tpu.memory_space<vmem>>, vector<1x1x16xf32>
    %29 = vector.shape_cast %28 : vector<1x1x16xf32> to vector<1x16xf32>
    %30 = vector.shape_cast %27 : vector<1x16xf32> to vector<1x1x16xf32>
    tpu.vector_store %arg5[%c0_20, %c0_21, %c0_22], %30 {strides = array<i32>} : memref<1x24x16xf32, #tpu.memory_space<vmem>>, vector<1x1x16xf32>,
    return
  }
  func.func @transform_0(%arg0: i32, %arg1: i32) -> (i32, i32, i32) {
    %c0_i32 = arith.constant 0 : i32
    %c0_i32_0 = arith.constant 0 : i32
    return %arg0, %arg1, %c0_i32 : i32, i32, i32
  }
  func.func @transform_1(%arg0: i32, %arg1: i32) -> (i32, i32, i32) {
    %c0_i32 = arith.constant 0 : i32
    %c0_i32_0 = arith.constant 0 : i32
    %c0_i32_1 = arith.constant 0 : i32
    %c0_i32_2 = arith.constant 0 : i32
    return %c0_i32, %c0_i32_0, %c0_i32_1 : i32, i32, i32
  }
  func.func @transform_2(%arg0: i32, %arg1: i32) -> (i32, i32) {
    %c0_i32 = arith.constant 0 : i32
    %c0_i32_0 = arith.constant 0 : i32
    %c0_i32_1 = arith.constant 0 : i32
    return %c0_i32, %c0_i32_0 : i32, i32
  }
  func.func @transform_3(%arg0: i32, %arg1: i32) -> (i32, i32, i32) {
    %c0_i32 = arith.constant 0 : i32
    %c0_i32_0 = arith.constant 0 : i32
    return %arg0, %arg1, %c0_i32 : i32, i32, i32
  }
}

</mosaic_0001>

<llo_original>
// kernel: tpu_custom_call.1
$region0: #{tpu_custom_call.1}
  #allocation0 [shape = 'u32[]', space=smem, size = 0x4, offset = 0x4, fixed_abs, tag = 'smem constant byte address 0x4 - core index']
  #allocation1 [shape = 'u32[144,128]{1,0:T(1,128)}', space=vmem, size = 0x12000, scoped, tag = 'internal scratch']
  #allocation2 [shape = 'f32[1,16]{1,0:T(1,128)}', space=vmem, size = 0x200, scoped, tag = 'scratch operand']
  %s0 = inlined_call_operand.vmem [shape: bf16[2,24,4], index: 0, kind: input, shape index: {}]
  %s1 = inlined_call_operand.vmem [shape: bf16[2,4,16], index: 1, kind: input, shape index: {}]
  %s2 = inlined_call_operand.vmem [shape: f32[1,16], index: 2, kind: input, shape index: {}]
  %s3 = inlined_call_operand.vmem [shape: f32[2,24,16], index: 3, kind: output, shape index: {}]
  %s4 = sld [smem:[#allocation0]]
  $region49: #{tpu_custom_call.1} parent=0
    _
  %s6 = ssub.s32 1, %s4
  %s7 = scalar_select 0, %s6, %s4
  loop: start=0, step=1, limit=4
  $region2: #{tpu_custom_call.1} parent=0 // loop_pre_header
    _
  $region3: #{tpu_custom_call.1} parent=0 // loop_header
    %s9 = sphi 0, %s13
    %p10 = scmp.ge.s32.totalorder %s9, 4
    %s16 = sphi 0, %s28
    %s17 = sphi 0, %s24
    %s18 = sphi 0, %s16
    %s19 = sphi 0, %s17
    %s20 = sphi 0, %s18
    %s21 = sphi 0, %s19
    %s33 = sphi 0, %s35
    %s36 = sphi 0, %s33
    %s37 = sphi 0, %s36
    %s53 = sphi 0, %s37
    %s57 = sphi 0, %s57
    %s59 = sphi 0, %s57
    %s60 = sphi 0, %s59
    %s74 = sphi 0, %s60
    %s78 = sphi 0, %s78
    %s80 = sphi 0, %s78
    %s81 = sphi 0, %s80
    %s95 = sphi 0, %s81
    %s103 = sphi 0, %s105
    %s106 = sphi 0, %s103
    %s107 = sphi 0, %s106
    %s123 = sphi 0, %s107
  $region4: #{tpu_custom_call.1} parent=0 // loop_header_branch
    %12 = sbr.rel (%p10) target = $region8
  $region5: #{tpu_custom_call.1} parent=0 // loop_body
    %s14 = ssub.s32 %s9, 1
    %s15 = ssub.s32 %s9, 2
    %s22 = sadd.s32 1, %s17
    %p23 = scmp.ge.s32.totalorder %s22, 1
    %s24 = scalar_select %p23, 0, %s22
    %s25 = sadd.s32 1, %s16
    %s26 = scalar_select %p23, %s25, %s16
    %p27 = scmp.ge.s32.totalorder %s26, 2
    %s28 = scalar_select %p27, 0, %s26
    %s29 = ssub.s32 %s16, %s28
    %s30 = ssub.s32 %s17, %s24
    %s31 = sor.u32 %s29, %s30
    %p32 = scmp.eq.s32.totalorder %s31, 0
    %s34 = sadd.s32 %s33, 1
    %s35 = scalar_select %p32, %s33, %s34
    %p38 = pneg %p32
    %p39 = scmp.eq.s32.totalorder %s9, 1
    %p40 = por %p38, %p39
    %p41 = scmp.ne.s32.totalorder %s33, %s36
    %p42 = scmp.eq.s32.totalorder %s9, 0
    %p43 = por %p41, %p42
    %p44 = scmp.ne.s32.totalorder %s33, %s36
    %p45 = scmp.eq.s32.totalorder %s14, 1
    %p46 = por %p44, %p45
    %p47 = scmp.ne.s32.totalorder %s36, %s37
    %p48 = scmp.eq.s32.totalorder %s14, 0
    %p49 = por %p47, %p48
    %p50 = scmp.ne.s32.totalorder %s36, %s37
    %p51 = scmp.eq.s32.totalorder %s15, 1
    %p52 = por %p50, %p51
    %p54 = scmp.ne.s32.totalorder %s37, %s53
    %p55 = scmp.eq.s32.totalorder %s15, 0
    %p56 = por %p54, %p55
    %s58 = sadd.s32 %s57, 1
    %p61 = scmp.eq.s32.totalorder %s9, 1
    %p62 = scmp.ne.s32.totalorder %s57, %s59
    %p63 = scmp.eq.s32.totalorder %s9, 0
    %p64 = por %p62, %p63
    %p65 = scmp.ne.s32.totalorder %s57, %s59
    %p66 = scmp.eq.s32.totalorder %s14, 1
    %p67 = por %p65, %p66
    %p68 = scmp.ne.s32.totalorder %s59, %s60
    %p69 = scmp.eq.s32.totalorder %s14, 0
    %p70 = por %p68, %p69
    %p71 = scmp.ne.s32.totalorder %s59, %s60
    %p72 = scmp.eq.s32.totalorder %s15, 1
    %p73 = por %p71, %p72
    %p75 = scmp.ne.s32.totalorder %s60, %s74
    %p76 = scmp.eq.s32.totalorder %s15, 0
    %p77 = por %p75, %p76
    %s79 = sadd.s32 %s78, 1
    %p82 = scmp.eq.s32.totalorder %s9, 1
    %p83 = scmp.ne.s32.totalorder %s78, %s80
    %p84 = scmp.eq.s32.totalorder %s9, 0
    %p85 = por %p83, %p84
    %p86 = scmp.ne.s32.totalorder %s78, %s80
    %p87 = scmp.eq.s32.totalorder %s14, 1
    %p88 = por %p86, %p87
    %p89 = scmp.ne.s32.totalorder %s80, %s81
    %p90 = scmp.eq.s32.totalorder %s14, 0
    %p91 = por %p89, %p90
    %p92 = scmp.ne.s32.totalorder %s80, %s81
    %p93 = scmp.eq.s32.totalorder %s15, 1
    %p94 = por %p92, %p93
    %p96 = scmp.ne.s32.totalorder %s81, %s95
    %p97 = scmp.eq.s32.totalorder %s15, 0
    %p98 = por %p96, %p97
    %s99 = ssub.s32 %s16, %s28
    %s100 = ssub.s32 %s17, %s24
    %s101 = sor.u32 %s99, %s100
    %p102 = scmp.eq.s32.totalorder %s101, 0
    %s104 = sadd.s32 %s103, 1
    %s105 = scalar_select %p102, %s103, %s104
    %p108 = pneg %p102
    %p109 = scmp.eq.s32.totalorder %s9, 1
    %p110 = por %p108, %p109
    %p111 = scmp.ne.s32.totalorder %s103, %s106
    %p112 = scmp.eq.s32.totalorder %s9, 0
    %p113 = por %p111, %p112
    %p114 = scmp.ne.s32.totalorder %s103, %s106
    %p115 = scmp.eq.s32.totalorder %s14, 1
    %p116 = por %p114, %p115
    %p117 = scmp.ne.s32.totalorder %s106, %s107
    %p118 = scmp.eq.s32.totalorder %s14, 0
    %p119 = por %p117, %p118
    %p120 = scmp.ne.s32.totalorder %s106, %s107
    %p121 = scmp.eq.s32.totalorder %s15, 1
    %p122 = por %p120, %p121
    %p124 = scmp.ne.s32.totalorder %s107, %s123
    %p125 = scmp.eq.s32.totalorder %s15, 0
    %p126 = por %p124, %p125
    %p127 = scmp.le.s32.totalorder 1, %s9
    %p128 = scmp.lt.s32.totalorder %s9, 3
    %p129 = pnand %p127, %p128
    %p130 = pneg %p129
    // Predicated region
    $region9: #{tpu_custom_call.1} parent=5 // pred_check
      _
    $region10: #{tpu_custom_call.1} parent=5 // pred_check_branch
      %132 = sbr.rel (%p129) target = $region12
    $region11: #{tpu_custom_call.1} parent=5 // pred_region
      %s133 = ssub.s32 %s9, 1
      // Predicated region
      $region13: #{tpu_custom_call.1} parent=11 // pred_check
        %p134 = pneg %p70
      $region14: #{tpu_custom_call.1} parent=11 // pred_check_branch
        %136 = sbr.rel (%p134) target = $region16
      $region15: #{tpu_custom_call.1} parent=11 // pred_region
        _
      $region16: #{tpu_custom_call.1} parent=11 // pred_fallthru
        _
      // Predicated region
      $region17: #{tpu_custom_call.1} parent=11 // pred_check
        %p137 = pneg %p91
      $region18: #{tpu_custom_call.1} parent=11 // pred_check_branch
        %139 = sbr.rel (%p137) target = $region20
      $region19: #{tpu_custom_call.1} parent=11 // pred_region
        _
      $region20: #{tpu_custom_call.1} parent=11 // pred_fallthru
        _
    $region12: #{tpu_custom_call.1} parent=5 // pred_fallthru
      _
    %p140 = scmp.lt.s32.totalorder %s9, 2
    // Predicated region
    $region21: #{tpu_custom_call.1} parent=5 // pred_check
      %p141 = pneg %p140
    $region22: #{tpu_custom_call.1} parent=5 // pred_check_branch
      %143 = sbr.rel (%p141) target = $region24
    $region23: #{tpu_custom_call.1} parent=5 // pred_region
      // Predicated region
      $region25: #{tpu_custom_call.1} parent=23 // pred_check
        %p144 = pneg %p43
      $region26: #{tpu_custom_call.1} parent=23 // pred_check_branch
        %146 = sbr.rel (%p144) target = $region28
      $region27: #{tpu_custom_call.1} parent=23 // pred_region
        %s147 = smul.u32 3, %s17
        %p148 = scmp.lt.s32.totalorder %s16, 1
        %s149 = scalar_select %p148, %s16, 1
        %p150 = scmp.lt.s32.totalorder %s147, 2
        %s151 = scalar_select %p150, %s147, 2
        %s152 = smul.addr %s149, 3
        %s153 = sadd.s32 %s151, %s152
        %s154 = smul.addr %s153, 4
        %s155 = scalar_lea.vmem %s0, %s154
        %s156 = smul.u32 3, %s17
      $region28: #{tpu_custom_call.1} parent=23 // pred_fallthru
        _
    $region24: #{tpu_custom_call.1} parent=5 // pred_fallthru
      _
    %p157 = scmp.le.s32.totalorder 1, %s9
    %p158 = scmp.lt.s32.totalorder %s9, 3
    %p159 = pnand %p157, %p158
    %p160 = pneg %p159
    // Predicated region
    $region29: #{tpu_custom_call.1} parent=5 // pred_check
      _
    $region30: #{tpu_custom_call.1} parent=5 // pred_check_branch
      %162 = sbr.rel (%p159) target = $region32
    $region31: #{tpu_custom_call.1} parent=5 // pred_region
      %s163 = ssub.s32 %s9, 1
      %s164 = smul.u32 3, %s19
      %p165 = scmp.lt.s32.totalorder %s18, 1
      %s166 = scalar_select %p165, %s18, 1
      %p167 = scmp.lt.s32.totalorder %s164, 2
      %s168 = scalar_select %p167, %s164, 2
      %s169 = smul.addr %s166, 3
      %s170 = sadd.s32 %s168, %s169
      %s171 = smul.addr %s170, 4
      %s172 = scalar_lea.vmem %s0, %s171
      %p173 = pneg %p49
      %p174 = pneg %p46
      %p175 = pneg %p70
      %p176 = pneg %p67
      %p177 = pneg %p91
      %p178 = pneg %p88
      %p179 = pneg %p119
      %p180 = pneg %p116
      %s181 = smul.u32 3, %s19
      %p182 = scmp.lt.s32.totalorder %s18, 1
      %s183 = scalar_select %p182, %s18, 1
      %p184 = scmp.lt.s32.totalorder %s181, 2
      %s185 = scalar_select %p184, %s181, 2
      %s186 = smul.addr %s183, 3
      %s187 = sadd.s32 %s185, %s186
      %s188 = smul.addr %s187, 8
      %s189 = scalar_lea.vmem %s3, %s188
      %s190 = smul.u32 3, %s19
      %p191 = scmp.lt.s32.totalorder %s18, 1
      %s192 = scalar_select %p191, %s18, 1
      %p193 = scmp.lt.s32.totalorder %s190, 2
      %s194 = scalar_select %p193, %s190, 2
      %s195 = smul.addr %s192, 3
      %s196 = sadd.s32 %s194, %s195
      %s197 = smul.addr %s196, 4
      %s198 = scalar_lea.vmem %s0, %s197
      %s199 = smul.u32 3, %s19
      %s200 = smul.u32 3, %s19
      %p201 = scmp.lt.s32.totalorder %s18, 1
      %s202 = scalar_select %p201, %s18, 1
      %p203 = scmp.lt.s32.totalorder %s200, 2
      %s204 = scalar_select %p203, %s200, 2
      %s205 = smul.addr %s202, 3
      %s206 = sadd.s32 %s204, %s205
      %s207 = smul.addr %s206, 8
      %s208 = scalar_lea.vmem %s3, %s207
      %s209 = smul.u32 3, %s19
      %p211 = scmp.eq.s32.totalorder %s19, 0
      // Predicated region
      $region33: #{tpu_custom_call.1} parent=31 // pred_check
        %p212 = pneg %p211
      $region34: #{tpu_custom_call.1} parent=31 // pred_check_branch
        %214 = sbr.rel (%p212) target = $region36
      $region35: #{tpu_custom_call.1} parent=31 // pred_region
        %vm215 = vcmask 122880
        %216 = vst.msk [vmem:[#allocation2] sm:$0x1] %vm215, 0.0
      $region36: #{tpu_custom_call.1} parent=31 // pred_fallthru
        _
      %v217 = vld [vmem:[#allocation2] sm:$0x1]
      %v218 = vld [vmem:[%s198] sm:$0xf]
      %v219 = vld [vmem:[%s198 + $0x4] sm:$0xf]
      %v220 = vld [vmem:[%s198 + $0x8] sm:$0xf]
      %v221 = vld [vmem:[%s1] sm:$0x3]
      %s222 = scalar_lea.vmem %s1, 2
      %v223 = vld [vmem:[%s222] sm:$0x3]
      %v227 = vunpack.c.l.b16 %v218
      %v228 = vunpack.c.l.b16 %v219
      %v229 = vunpack.c.l.b16 %v220
      %v230 = vpack.c.b16 %v228, %v227
      %v231 = vpack.c.b16 %v229, %v229
      %vm232 = vcmask 31744
      %v234 = vsel %vm232, %v230, 0
      %v237 = vsel %vm232, %v231, 0
      %vm239 = vcmask 1041408
      %v241 = vsel %vm239, %v223, 0
      %243 = vmatprep.subr.bf16.mxu0 0
      %244 = vmatpush1.bf16.msra.mxu0 0
      %245 = vmatprep.subr.bf16.mxu0 0
      %246 = vmatpush1.bf16.msra.mxu0 0
      %247 = vmatprep.subr.bf16.mxu0 0
      %248 = vmatpush1.bf16.msra.mxu0 0
      %249 = vmatprep.subr.bf16.mxu0 0
      %250 = vmatpush1.bf16.msra.mxu0 0
      %251 = vmatprep.subr.bf16.mxu0 0
      %252 = vmatpush1.bf16.msra.mxu0 0
      %253 = vmatprep.subr.bf16.mxu0 0
      %254 = vmatpush1.bf16.msra.mxu0 0
      %255 = vmatprep.subr.bf16.mxu0 0
      %256 = vmatpush1.bf16.msra.mxu0 0
      %257 = vmatprep.subr.bf16.mxu0 0
      %258 = vmatpush1.bf16.msra.mxu0 %v241
      %259 = vmatprep.subr.bf16.mxu0 0
      %260 = vmatpush2.bf16.msra.mxu0 0
      %261 = vmatprep.subr.bf16.mxu0 0
      %262 = vmatpush2.bf16.msra.mxu0 0
      %263 = vmatprep.subr.bf16.mxu0 0
      %264 = vmatpush2.bf16.msra.mxu0 0
      %265 = vmatprep.subr.bf16.mxu0 0
      %266 = vmatpush2.bf16.msra.mxu0 0
      %267 = vmatprep.subr.bf16.mxu0 0
      %268 = vmatpush2.bf16.msra.mxu0 0
      %269 = vmatprep.subr.bf16.mxu0 0
      %270 = vmatpush2.bf16.msra.mxu0 0
      %271 = vmatprep.subr.bf16.mxu0 0
      %272 = vmatpush2.bf16.msra.mxu0 0
      %273 = vmatprep.subr.bf16.mxu0 0
      %274 = vmatpush2.bf16.msra.mxu0 0
      %275 = vmatprep.mubr.bf16.mxu0 0
      %276 = vmatmul.mubr.bf16.gmra.mxu0 %v234
      %v277 = vpop.f32.mrf.mxu0
      %v278 = vadd.f32 0.0, %v277
      %v279 = vpop.f32.mrf.mxu0
      %v280 = vpop.f32.mrf.mxu0
      %v281 = vadd.f32 0.0, %v280
      %v282 = vpop.f32.mrf.mxu0
      %283 = vmatprep.mubr.bf16.mxu0 0
      %284 = vmatmul.mubr.bf16.gmra.mxu0 %v237
      %v285 = vpop.f32.mrf.mxu0
      %v286 = vadd.f32 0.0, %v285
      %v287 = vpop.f32.mrf.mxu0
      %v288 = vpop.f32.mrf.mxu0
      %v289 = vpop.f32.mrf.mxu0
      %290 = vdwg.mxu0
      %vm294 = vcmask 1040384
      %v295 = vrot.slane %v278, 7
      %v296 = vrot.slane %v281, 7
      %v297 = vsel %vm294, %v295, %v296
      %v298 = vrot.slane %v286, 7
      %v299 = vsel %vm294, %v296, %v298
      %v303 = vsel %vm294, 0.0, %v295
      %v305 = vsel %vm239, %v221, 0
      %307 = vmatprep.subr.bf16.mxu0 0
      %308 = vmatpush1.bf16.msra.mxu0 0
      %309 = vmatprep.subr.bf16.mxu0 0
      %310 = vmatpush1.bf16.msra.mxu0 0
      %311 = vmatprep.subr.bf16.mxu0 0
      %312 = vmatpush1.bf16.msra.mxu0 0
      %313 = vmatprep.subr.bf16.mxu0 0
      %314 = vmatpush1.bf16.msra.mxu0 0
      %315 = vmatprep.subr.bf16.mxu0 0
      %316 = vmatpush1.bf16.msra.mxu0 0
      %317 = vmatprep.subr.bf16.mxu0 0
      %318 = vmatpush1.bf16.msra.mxu0 0
      %319 = vmatprep.subr.bf16.mxu0 0
      %320 = vmatpush1.bf16.msra.mxu0 0
      %321 = vmatprep.subr.bf16.mxu0 0
      %322 = vmatpush1.bf16.msra.mxu0 %v305
      %323 = vmatprep.subr.bf16.mxu0 0
      %324 = vmatpush2.bf16.msra.mxu0 0
      %325 = vmatprep.subr.bf16.mxu0 0
      %326 = vmatpush2.bf16.msra.mxu0 0
      %327 = vmatprep.subr.bf16.mxu0 0
      %328 = vmatpush2.bf16.msra.mxu0 0
      %329 = vmatprep.subr.bf16.mxu0 0
      %330 = vmatpush2.bf16.msra.mxu0 0
      %331 = vmatprep.subr.bf16.mxu0 0
      %332 = vmatpush2.bf16.msra.mxu0 0
      %333 = vmatprep.subr.bf16.mxu0 0
      %334 = vmatpush2.bf16.msra.mxu0 0
      %335 = vmatprep.subr.bf16.mxu0 0
      %336 = vmatpush2.bf16.msra.mxu0 0
      %337 = vmatprep.subr.bf16.mxu0 0
      %338 = vmatpush2.bf16.msra.mxu0 0
      %339 = vmatprep.mubr.bf16.mxu0 0
      %340 = vmatmul.mubr.bf16.gmra.mxu0 %v234
      %v341 = vpop.f32.mrf.mxu0
      %v342 = vadd.f32 %v303, %v341
      %v343 = vpop.f32.mrf.mxu0
      %v344 = vpop.f32.mrf.mxu0
      %v345 = vadd.f32 %v297, %v344
      %v346 = vpop.f32.mrf.mxu0
      %347 = vmatprep.mubr.bf16.mxu0 0
      %348 = vmatmul.mubr.bf16.gmra.mxu0 %v237
      %v349 = vpop.f32.mrf.mxu0
      %v350 = vadd.f32 %v299, %v349
      %v351 = vpop.f32.mrf.mxu0
      %v352 = vpop.f32.mrf.mxu0
      %v353 = vpop.f32.mrf.mxu0
      %354 = vdwg.mxu0
      %v355 = vadd.f32 %v286, 0.0
      %vm356 = vcmask 130055
      %357 = vst.msk [vmem:[#allocation2 - $0x7] sm:$0x80] %vm356, %v355
      %v358 = vld [vmem:[%s2] sm:$0x1]
      %v360 = vlaneseq
      %v361 = vshrl.u32 %v360, 7
      %v362 = vsub.s32 0, %v361
      %v363 = vrot.slane %v358, %v362
      %v365 = vadd.f32 %v342, %v363
      %v366 = vadd.f32 %v345, %v363
      %v367 = vadd.f32 %v350, %v363
      %vm368 = vcmask 130048
      %369 = vst.msk [vmem:[%s208] sm:$0xff] %vm368, %v365
      %370 = vst.msk [vmem:[%s208 + $0x8] sm:$0xff] %vm368, %v366
      %371 = vst.msk [vmem:[%s208 + $0x10] sm:$0xff] %vm368, %v367
      %v372 = vadd.f32 %v365, %v217
      %vm373 = vcmask 122880
      %374 = vst.msk [vmem:[%s208] sm:$0x1] %vm373, %v372
      %s375 = smul.u32 3, %s19
      %p376 = scmp.lt.s32.totalorder %s18, 1
      %s377 = scalar_select %p376, %s18, 1
      %p378 = scmp.lt.s32.totalorder %s375, 2
      %s379 = scalar_select %p378, %s375, 2
      %s380 = smul.addr %s377, 3
      %s381 = sadd.s32 %s379, %s380
      %s382 = smul.addr %s381, 8
      %s383 = scalar_lea.vmem %s3, %s382
      // Predicated region
      $region37: #{tpu_custom_call.1} parent=31 // pred_check
        %p384 = pneg %p116
      $region38: #{tpu_custom_call.1} parent=31 // pred_check_branch
        %386 = sbr.rel (%p384) target = $region40
      $region39: #{tpu_custom_call.1} parent=31 // pred_region
        %s387 = smul.u32 3, %s19
      $region40: #{tpu_custom_call.1} parent=31 // pred_fallthru
        _
    $region32: #{tpu_custom_call.1} parent=5 // pred_fallthru
      _
    %p388 = scmp.le.s32.totalorder 2, %s9
    // Predicated region
    $region41: #{tpu_custom_call.1} parent=5 // pred_check
      %p389 = pneg %p388
    $region42: #{tpu_custom_call.1} parent=5 // pred_check_branch
      %391 = sbr.rel (%p389) target = $region44
    $region43: #{tpu_custom_call.1} parent=5 // pred_region
      %s392 = ssub.s32 %s9, 2
      // Predicated region
      $region45: #{tpu_custom_call.1} parent=43 // pred_check
        %p393 = pneg %p122
      $region46: #{tpu_custom_call.1} parent=43 // pred_check_branch
        %395 = sbr.rel (%p393) target = $region48
      $region47: #{tpu_custom_call.1} parent=43 // pred_region
        %s396 = smul.u32 3, %s21
        %p397 = scmp.lt.s32.totalorder %s20, 1
        %s398 = scalar_select %p397, %s20, 1
        %p399 = scmp.lt.s32.totalorder %s396, 2
        %s400 = scalar_select %p399, %s396, 2
        %s401 = smul.addr %s398, 3
        %s402 = sadd.s32 %s400, %s401
        %s403 = smul.addr %s402, 8
        %s404 = scalar_lea.vmem %s3, %s403
      $region48: #{tpu_custom_call.1} parent=43 // pred_fallthru
        _
    $region44: #{tpu_custom_call.1} parent=5 // pred_fallthru
      _
  $region6: #{tpu_custom_call.1} parent=0 // loop_footer
    %s13 = sadd.s32 1, %s9
  $region7: #{tpu_custom_call.1} parent=0 // loop_footer_branch
    %8 = sbr.rel target = $region3
  $region8: #{tpu_custom_call.1} parent=0 // loop_exit
    _

</llo_original>
